<compile_context>
chip_gen: v7x
topology: tpu7x:2x2x1
jax: 0.10.0
libtpu: 0.0.40
codegen_flags: <defaults>
</compile_context>

<pallas_src>
import jax
import jax.numpy as jnp
from jax.experimental import pallas as pl
from jax.experimental.pallas import tpu as pltpu


def l4_tower_kernel(x_ref, w_ref, b_ref, o_ref, acc_ref):
    # x_ref: (TB, TK)  w_ref: (TK, 1)  b_ref: (1,) scalar in SMEM
    # o_ref: (TB, 1)   acc_ref: (TB, 1) f32 scratch (persists across K steps)
    k = pl.program_id(1)

    @pl.when(k == 0)
    def _init():
        acc_ref[...] = jnp.zeros_like(acc_ref)

    acc_ref[...] += jnp.dot(x_ref[...], w_ref[...],
                            preferred_element_type=jnp.float32)

    @pl.when(k == pl.num_programs(1) - 1)
    def _finalize():
        z = acc_ref[...] + b_ref[0]
        # Exact sigmoid on a (TB, 1) tensor once per batch tile: negligible
        # next to the x DMA traffic, and bit-faithful to the reference module.
        o_ref[...] = (1.0 / (1.0 + jnp.exp(-z))).astype(o_ref.dtype)


def l4_tower(x, w, b, *, tile_b=512, tile_k=2048, vmem_limit_bytes=None):
    """sigmoid(x @ w + b).  x: [B, H], w: [H, 1], b: [1] (or scalar) -> [B, 1]."""
    B, H = x.shape
    assert w.shape == (H, 1), w.shape
    b = jnp.asarray(b, dtype=jnp.float32).reshape((1,))

    # ---- tile selection ----------------------------------------------------
    # Batch tile: multiple of 8 (f32 sublane) unless it covers the whole batch.
    if B <= tile_b:
        tile_b = B
    else:
        tile_b = max(8, (tile_b // 8) * 8)
    # Hidden tile: only tile K when it is lane-aligned and divides H evenly
    # (a ragged K tile would fold padded garbage into the running accumulator).
    if H <= tile_k or tile_k % 128 != 0 or H % tile_k != 0:
        tile_k = H

    grid = (pl.cdiv(B, tile_b), pl.cdiv(H, tile_k))

    # Advisory cost hint: this call is mem-bound on x traffic.
    bytes_accessed = (x.size * x.dtype.itemsize
                      + w.size * w.dtype.itemsize
                      + b.size * b.dtype.itemsize
                      + B * x.dtype.itemsize)
    cost = pl.CostEstimate(flops=2 * B * H, transcendentals=B,
                           bytes_accessed=bytes_accessed)

    cp_kwargs = dict(dimension_semantics=("parallel", "arbitrary"))
    if vmem_limit_bytes is not None:
        cp_kwargs["vmem_limit_bytes"] = vmem_limit_bytes

    return pl.pallas_call(
        l4_tower_kernel,
        out_shape=jax.ShapeDtypeStruct((B, 1), x.dtype),
        grid_spec=pltpu.PrefetchScalarGridSpec(
            num_scalar_prefetch=0,
            grid=grid,
            in_specs=[
                pl.BlockSpec((tile_b, tile_k), lambda i, k: (i, k)),
                pl.BlockSpec((tile_k, 1), lambda i, k: (k, 0)),
                pl.BlockSpec(memory_space=pltpu.MemorySpace.SMEM),
            ],
            out_specs=pl.BlockSpec((tile_b, 1), lambda i, k: (i, 0)),
            scratch_shapes=[pltpu.VMEM((tile_b, 1), jnp.float32)],
        ),
        compiler_params=pltpu.CompilerParams(**cp_kwargs),
        cost_estimate=cost,
    )(x, w, b)


if __name__ == "__main__":
    key = jax.random.PRNGKey(0)

    # ---- case 1: toy shape implied by the module (batch=8, hidden=32) ------
    B, H = 8, 32
    kx, kw, kb, k2 = jax.random.split(key, 4)
    x = jax.random.normal(kx, (B, H), dtype=jnp.float32)
    bound = 1.0 / (H ** 0.5)  # nn.Linear-style U(-1/sqrt(H), 1/sqrt(H)) init
    w = jax.random.uniform(kw, (H, 1), minval=-bound, maxval=bound,
                           dtype=jnp.float32)
    b = jax.random.uniform(kb, (1,), minval=-bound, maxval=bound,
                           dtype=jnp.float32)

    out = jax.block_until_ready(l4_tower(x, w, b))
    ref = jax.nn.sigmoid(
        jnp.dot(x, w, precision=jax.lax.Precision.HIGHEST) + b[0])
    assert out.shape == (B, 1)
    assert jnp.allclose(out, ref, atol=1e-5, rtol=1e-5), \
        float(jnp.max(jnp.abs(out - ref)))

    # ---- case 2: exercise the tiled/pipelined path (multiple batch tiles,
    # ragged last batch tile, K-axis accumulation across two hidden tiles) ---
    B2, H2 = 272, 256
    kx2, kw2, kb2 = jax.random.split(k2, 3)
    x2 = jax.random.normal(kx2, (B2, H2), dtype=jnp.float32)
    w2 = jax.random.normal(kw2, (H2, 1), dtype=jnp.float32) * (1.0 / H2 ** 0.5)
    b2 = jax.random.normal(kb2, (1,), dtype=jnp.float32)

    out2 = jax.block_until_ready(l4_tower(x2, w2, b2, tile_b=128, tile_k=128))
    ref2 = jax.nn.sigmoid(
        jnp.dot(x2, w2, precision=jax.lax.Precision.HIGHEST) + b2[0])
    assert out2.shape == (B2, 1)
    assert jnp.allclose(out2, ref2, atol=1e-5, rtol=1e-5), \
        float(jnp.max(jnp.abs(out2 - ref2)))

    print("KERNEL_OK")
</pallas_src>

<mosaic_0001>
module attributes {stable_mosaic.version = 11 : i64} {
  func.func @l4_tower_kernel(%arg0: i32, %arg1: i32, %arg2: memref<8x32xf32, #tpu.memory_space<vmem>>, %arg3: memref<32x1xf32, #tpu.memory_space<vmem>>, %arg4: memref<1xf32, #tpu.memory_space<smem>>, %arg5: memref<8x1xf32, #tpu.memory_space<vmem>>, %arg6: memref<8x1xf32, #tpu.memory_space<vmem>>) attributes {dimension_semantics = [#tpu.dimension_semantics<parallel>, #tpu.dimension_semantics<arbitrary>], iteration_bounds = array<i64: 1, 1>, scalar_prefetch = 0 : i64, scratch_operands = 1 : i64, tpu.core_type = #tpu.core_type<tc>, window_params = [{transform_indices = @transform_0, window_bounds = array<i64: 8, 32>}, {transform_indices = @transform_1, window_bounds = array<i64: 32, 1>}, {transform_indices = @transform_2, window_bounds = array<i64: 1>}, {transform_indices = @transform_3, window_bounds = array<i64: 8, 1>}]} {
    %c0_i32 = arith.constant 0 : i32
    %0 = arith.cmpi eq, %arg1, %c0_i32 : i32
    %1 = arith.extui %0 : i1 to i32
    %c0_i32_0 = arith.constant 0 : i32
    %2 = arith.cmpi ne, %1, %c0_i32_0 : i32
    scf.if %2 {
      %cst_10 = arith.constant 0.000000e+00 : f32
      %12 = vector.broadcast %cst_10 : f32 to vector<8x1xf32>
      %c0_11 = arith.constant 0 : index
      %c0_12 = arith.constant 0 : index
      %13 = vector.load %arg6[%c0_11, %c0_12] : memref<8x1xf32, #tpu.memory_space<vmem>>, vector<8x1xf32>
      tpu.vector_store %arg6[%c0_11, %c0_12], %12 {strides = array<i32>} : memref<8x1xf32, #tpu.memory_space<vmem>>, vector<8x1xf32>,
    } else {
    }
    %c0 = arith.constant 0 : index
    %c0_1 = arith.constant 0 : index
    %3 = vector.load %arg6[%c0, %c0_1] : memref<8x1xf32, #tpu.memory_space<vmem>>, vector<8x1xf32>
    %c0_2 = arith.constant 0 : index
    %c0_3 = arith.constant 0 : index
    %4 = vector.load %arg2[%c0_2, %c0_3] : memref<8x32xf32, #tpu.memory_space<vmem>>, vector<8x32xf32>
    %c0_4 = arith.constant 0 : index
    %c0_5 = arith.constant 0 : index
    %5 = vector.load %arg3[%c0_4, %c0_5] : memref<32x1xf32, #tpu.memory_space<vmem>>, vector<32x1xf32>
    %cst = arith.constant dense<0.000000e+00> : vector<8x1xf32>
    %6 = tpu.matmul %4, %5, %cst {dimension_numbers = #tpu.dot_dimension_numbers<[1], [0], [0], [1], [0, 0, 1, 1], [], []>} : vector<8x32xf32>, vector<32x1xf32>, vector<8x1xf32> -> vector<8x1xf32>
    %7 = arith.addf %3, %6 : vector<8x1xf32>
    %c0_6 = arith.constant 0 : index
    %c0_7 = arith.constant 0 : index
    %8 = vector.load %arg6[%c0_6, %c0_7] : memref<8x1xf32, #tpu.memory_space<vmem>>, vector<8x1xf32>
    tpu.vector_store %arg6[%c0_6, %c0_7], %7 {strides = array<i32>} : memref<8x1xf32, #tpu.memory_space<vmem>>, vector<8x1xf32>,
    %c0_i32_8 = arith.constant 0 : i32
    %9 = arith.cmpi eq, %arg1, %c0_i32_8 : i32
    %10 = arith.extui %9 : i1 to i32
    %c0_i32_9 = arith.constant 0 : i32
    %11 = arith.cmpi ne, %10, %c0_i32_9 : i32
    scf.if %11 {
      %c0_10 = arith.constant 0 : index
      %c0_11 = arith.constant 0 : index
      %12 = vector.load %arg6[%c0_10, %c0_11] : memref<8x1xf32, #tpu.memory_space<vmem>>, vector<8x1xf32>
      %c0_12 = arith.constant 0 : index
      %13 = memref.load %arg4[%c0_12] : memref<1xf32, #tpu.memory_space<smem>>
      %14 = vector.broadcast %13 : f32 to vector<8x1xf32>
      %15 = arith.addf %12, %14 : vector<8x1xf32>
      %cst_13 = arith.constant 0.000000e+00 : f32
      %16 = vector.broadcast %cst_13 : f32 to vector<8x1xf32>
      %17 = arith.subf %16, %15 : vector<8x1xf32>
      %18 = math.exp %17 : vector<8x1xf32>
      %cst_14 = arith.constant 1.000000e+00 : f32
      %19 = vector.broadcast %cst_14 : f32 to vector<8x1xf32>
      %20 = arith.addf %19, %18 : vector<8x1xf32>
      %cst_15 = arith.constant 1.000000e+00 : f32
      %21 = vector.broadcast %cst_15 : f32 to vector<8x1xf32>
      %22 = arith.divf %21, %20 : vector<8x1xf32>
      %c0_16 = arith.constant 0 : index
      %c0_17 = arith.constant 0 : index
      %23 = vector.load %arg5[%c0_16, %c0_17] : memref<8x1xf32, #tpu.memory_space<vmem>>, vector<8x1xf32>
      tpu.vector_store %arg5[%c0_16, %c0_17], %22 {strides = array<i32>} : memref<8x1xf32, #tpu.memory_space<vmem>>, vector<8x1xf32>,
    } else {
    }
    return
  }
  func.func @transform_0(%arg0: i32, %arg1: i32) -> (i32, i32) {
    %c0_i32 = arith.constant 0 : i32
    return %arg0, %arg1 : i32, i32
  }
  func.func @transform_1(%arg0: i32, %arg1: i32) -> (i32, i32) {
    %c0_i32 = arith.constant 0 : i32
    %c0_i32_0 = arith.constant 0 : i32
    return %arg1, %c0_i32 : i32, i32
  }
  func.func @transform_2(%arg0: i32, %arg1: i32) -> i32 {
    %c0_i32 = arith.constant 0 : i32
    %c0_i32_0 = arith.constant 0 : i32
    return %c0_i32 : i32
  }
  func.func @transform_3(%arg0: i32, %arg1: i32) -> (i32, i32) {
    %c0_i32 = arith.constant 0 : i32
    %c0_i32_0 = arith.constant 0 : i32
    return %arg0, %c0_i32 : i32, i32
  }
}

</mosaic_0001>

<llo_original>
// kernel: tpu_custom_call.1
$region0: #{tpu_custom_call.1}
  #allocation0 [shape = 'u32[]', space=smem, size = 0x4, offset = 0x4, fixed_abs, tag = 'smem constant byte address 0x4 - core index']
  #allocation1 [shape = 'u32[144,128]{1,0:T(1,128)}', space=vmem, size = 0x12000, scoped, tag = 'internal scratch']
  #allocation2 [shape = 'f32[8,1]{1,0:T(8,128)}', space=vmem, size = 0x1000, scoped, tag = 'scratch operand']
  #allocation3 [shape = 'f32[1]{0:T(128)S(6)}', space=smem, size = 0x200, scoped, tag = 'scoped memory for tpu_custom_call.1']
  %s0 = inlined_call_operand.vmem [shape: f32[8,32], index: 0, kind: input, shape index: {}]
  %s1 = inlined_call_operand.vmem [shape: f32[32,1], index: 1, kind: input, shape index: {}]
  %s2 = inlined_call_operand.<no memory space> [shape: f32[1], index: 2, kind: input, shape index: {}]
  %s3 = inlined_call_operand.vmem [shape: f32[8,1], index: 3, kind: output, shape index: {}]
  %s4 = sld [smem:[#allocation0]]
  $region30: #{tpu_custom_call.1} parent=0
    _
  %s6 = ssub.s32 1, %s4
  %s7 = scalar_select 0, %s6, %s4
  %8 = sst [smem:[#allocation3]] %s2
  // Predicated region
  $region2: #{tpu_custom_call.1} parent=0 // pred_check
    _
  $region3: #{tpu_custom_call.1} parent=0 // pred_check_branch
    %10 = sbr.rel (0) target = $region5
  $region4: #{tpu_custom_call.1} parent=0 // pred_region
    _
  $region5: #{tpu_custom_call.1} parent=0 // pred_fallthru
    _
  // Predicated region
  $region6: #{tpu_custom_call.1} parent=0 // pred_check
    _
  $region7: #{tpu_custom_call.1} parent=0 // pred_check_branch
    %12 = sbr.rel (0) target = $region9
  $region8: #{tpu_custom_call.1} parent=0 // pred_region
    _
  $region9: #{tpu_custom_call.1} parent=0 // pred_fallthru
    _
  // Predicated region
  $region10: #{tpu_custom_call.1} parent=0 // pred_check
    _
  $region11: #{tpu_custom_call.1} parent=0 // pred_check_branch
    %14 = sbr.rel (0) target = $region13
  $region12: #{tpu_custom_call.1} parent=0 // pred_region
    _
  $region13: #{tpu_custom_call.1} parent=0 // pred_fallthru
    _
  %p15 = scmp.eq.s32.totalorder 0, 0
  // Predicated region
  $region14: #{tpu_custom_call.1} parent=0 // pred_check
    %p16 = pneg %p15
  $region15: #{tpu_custom_call.1} parent=0 // pred_check_branch
    %18 = sbr.rel (%p16) target = $region17
  $region16: #{tpu_custom_call.1} parent=0 // pred_region
    %vm19 = vcmask 7168
    %20 = vst.msk [vmem:[#allocation2] sm:$0xff] %vm19, 0.0
  $region17: #{tpu_custom_call.1} parent=0 // pred_fallthru
    _
  %v21 = vld [vmem:[#allocation2] sm:$0xff]
  %v22 = vld [vmem:[%s0] sm:$0xff]
  %v23 = vld [vmem:[%s1] sm:$0xff]
  %v24 = vld [vmem:[%s1 + $0x8] sm:$0xff]
  %v25 = vld [vmem:[%s1 + $0x10] sm:$0xff]
  %v26 = vld [vmem:[%s1 + $0x18] sm:$0xff]
  %vm27 = vcmask 261120
  %v29 = vsel %vm27, %v22, 0
  %31 = vmatprep.subr.mxu0 0.0
  %32 = vmatpush1.msra.mxu0 %v23
  %33 = vmatprep.subr.mxu0 0.0
  %34 = vmatpush1.msra.mxu0 %v24
  %35 = vmatprep.subr.mxu0 0.0
  %36 = vmatpush1.msra.mxu0 %v25
  %37 = vmatprep.subr.mxu0 0.0
  %38 = vmatpush1.msra.mxu0 %v26
  %39 = vmatprep.subr.mxu0 0.0
  %40 = vmatpush1.msra.mxu0 0.0
  %41 = vmatprep.subr.mxu0 0.0
  %42 = vmatpush1.msra.mxu0 0.0
  %43 = vmatprep.subr.mxu0 0.0
  %44 = vmatpush1.msra.mxu0 0.0
  %45 = vmatprep.subr.mxu0 0.0
  %46 = vmatpush1.msra.mxu0 0.0
  %47 = vmatprep.subr.mxu0 0.0
  %48 = vmatpush1.msra.mxu0 0.0
  %49 = vmatprep.subr.mxu0 0.0
  %50 = vmatpush1.msra.mxu0 0.0
  %51 = vmatprep.subr.mxu0 0.0
  %52 = vmatpush1.msra.mxu0 0.0
  %53 = vmatprep.subr.mxu0 0.0
  %54 = vmatpush1.msra.mxu0 0.0
  %55 = vmatprep.subr.mxu0 0.0
  %56 = vmatpush1.msra.mxu0 0.0
  %57 = vmatprep.subr.mxu0 0.0
  %58 = vmatpush1.msra.mxu0 0.0
  %59 = vmatprep.subr.mxu0 0.0
  %60 = vmatpush1.msra.mxu0 0.0
  %61 = vmatprep.subr.mxu0 0.0
  %62 = vmatpush1.msra.mxu0 0.0
  %63 = vmatprep.subr.mxu0 0.0
  %64 = vmatpush1.msra.mxu0 0.0
  %65 = vmatprep.subr.mxu0 0.0
  %66 = vmatpush1.msra.mxu0 0.0
  %67 = vmatprep.subr.mxu0 0.0
  %68 = vmatpush1.msra.mxu0 0.0
  %69 = vmatprep.subr.mxu0 0.0
  %70 = vmatpush1.msra.mxu0 0.0
  %71 = vmatprep.subr.mxu0 0.0
  %72 = vmatpush1.msra.mxu0 0.0
  %73 = vmatprep.subr.mxu0 0.0
  %74 = vmatpush1.msra.mxu0 0.0
  %75 = vmatprep.subr.mxu0 0.0
  %76 = vmatpush1.msra.mxu0 0.0
  %77 = vmatprep.subr.mxu0 0.0
  %78 = vmatpush1.msra.mxu0 0.0
  %79 = vmatprep.subr.mxu0 0.0
  %80 = vmatpush1.msra.mxu0 0.0
  %81 = vmatprep.subr.mxu0 0.0
  %82 = vmatpush1.msra.mxu0 0.0
  %83 = vmatprep.subr.mxu0 0.0
  %84 = vmatpush1.msra.mxu0 0.0
  %85 = vmatprep.subr.mxu0 0.0
  %86 = vmatpush1.msra.mxu0 0.0
  %87 = vmatprep.subr.mxu0 0.0
  %88 = vmatpush1.msra.mxu0 0.0
  %89 = vmatprep.subr.mxu0 0.0
  %90 = vmatpush1.msra.mxu0 0.0
  %91 = vmatprep.subr.mxu0 0.0
  %92 = vmatpush1.msra.mxu0 0.0
  %93 = vmatprep.subr.mxu0 0.0
  %94 = vmatpush1.msra.mxu0 0.0
  %95 = vmatprep.mubr.f32.mxu0 0.0
  %96 = vmatmul.mubr.f32.gmra.mrb[0].mxu0 %v29
  %v97 = vpop.f32.mrb[0].mxu0
  %v98 = vadd.f32 0.0, %v97
  %v99 = vpop.f32.mrb[0].mxu0
  %100 = vdwg.mxu0
  %v101 = vadd.f32 %v21, %v98
  %vm102 = vcmask 7168
  %103 = vst.msk [vmem:[#allocation2] sm:$0xff] %vm102, %v101
  // Predicated region
  $region18: #{tpu_custom_call.1} parent=0 // pred_check
    %p104 = pneg %p15
  $region19: #{tpu_custom_call.1} parent=0 // pred_check_branch
    %106 = sbr.rel (%p104) target = $region21
  $region20: #{tpu_custom_call.1} parent=0 // pred_region
    %v107 = vld [vmem:[#allocation2] sm:$0xff]
    %s108 = sld [smem:[#allocation3]]
    %v109 = vstv %s108
    %v110 = vadd.f32 %v107, %v109
    %v111 = vsub.f32 0.0, %v110
    %v112 = vmul.f32 %v111, 1.442695
    %v113 = vpow.pop %v112
    %v114 = vadd.f32 %v113, 1.0
    %v115 = vrcp.pop %v114
    %v116 = vmul.f32 1.0, %v115
    %117 = vst.msk [vmem:[%s3] sm:$0xff] %vm102, %v116
  $region21: #{tpu_custom_call.1} parent=0 // pred_fallthru
    _
  // Predicated region
  $region22: #{tpu_custom_call.1} parent=0 // pred_check
    _
  $region23: #{tpu_custom_call.1} parent=0 // pred_check_branch
    %119 = sbr.rel (0) target = $region25
  $region24: #{tpu_custom_call.1} parent=0 // pred_region
    _
  $region25: #{tpu_custom_call.1} parent=0 // pred_fallthru
    _
  // Predicated region
  $region26: #{tpu_custom_call.1} parent=0 // pred_check
    _
  $region27: #{tpu_custom_call.1} parent=0 // pred_check_branch
    %121 = sbr.rel (0) target = $region29
  $region28: #{tpu_custom_call.1} parent=0 // pred_region
    _
  $region29: #{tpu_custom_call.1} parent=0 // pred_fallthru
    _

</llo_original>
